<compile_context>
chip_gen: v7x
topology: tpu7x:2x2x1
jax: 0.10.0
libtpu: 0.0.40
codegen_flags: <defaults>
</compile_context>

<pallas_src>
import functools

import jax
import jax.numpy as jnp
from jax import lax
from jax.experimental import pallas as pl
from jax.experimental.pallas import tpu as pltpu

SUBLANES = 8
LANES = 128
# 2048 rows x 128 lanes x 4B = 1 MiB per f32 input block.
BLOCK_ROWS_MAX = 2048


def _round_up(v, m):
    return -(-v // m) * m


def _bce_kernel(x_ref, y_ref, o_ref, acc_ref, *,
                n, block_rows, blocks_per_core, needs_mask):
    c = pl.program_id(0)      # parallel (core) axis
    i = pl.program_id(1)      # reduction axis over row-blocks

    @pl.when(i == 0)
    def _():
        acc_ref[...] = jnp.zeros_like(acc_ref)

    # Cast after load: HBM -> VMEM traffic stays in the native dtype.
    x = x_ref[...].astype(jnp.float32)
    y = y_ref[...].astype(jnp.float32)

    # PyTorch F.binary_cross_entropy clamps each log term at -100 so a zero
    # weight exactly cancels a -inf log (keep the clamp before the multiply).
    log_x = jnp.maximum(jnp.log(x), jnp.float32(-100.0))
    log_1mx = jnp.maximum(jnp.log1p(-x), jnp.float32(-100.0))
    losses = -(y * log_x + (1.0 - y) * log_1mx)

    if needs_mask:
        # Zero the contribution of tail / padding elements (flat index >= n).
        # int32 flat index is fine for n < 2**31 elements.
        block_id = c * blocks_per_core + i
        row = block_id * block_rows + lax.broadcasted_iota(
            jnp.int32, (block_rows, LANES), 0)
        lane = lax.broadcasted_iota(jnp.int32, (block_rows, LANES), 1)
        flat = row * LANES + lane
        losses = jnp.where(flat < n, losses, jnp.float32(0.0))

    # Vector-tree accumulation: fold the block to one (8,128) vreg and add it
    # into the resident VMEM accumulator (VPU adds only; no per-step XLU
    # cross-lane reduce, no serial scalar SMEM read-modify-write).
    acc_ref[...] += losses.reshape(
        block_rows // SUBLANES, SUBLANES, LANES).sum(axis=0)

    @pl.when(i == pl.num_programs(1) - 1)
    def _():
        # One cross-lane reduce + scale per core.
        o_ref[0, 0] = jnp.sum(acc_ref[...]) * jnp.float32(1.0 / n)


def cls_loss(x, label):
    """Equivalent of Cls_Loss.forward: mean binary cross entropy."""
    n = x.size
    xf = x.reshape(-1)
    yf = label.reshape(-1)

    # Minimal pad (< 128 elements, only when needed) so the lane-dense
    # (rows, 128) reshape is possible.  Pad values are irrelevant: the kernel
    # masks on the true element count n.
    pad = (-n) % LANES
    if pad:
        xf = jnp.pad(xf, (0, pad), constant_values=1)
        yf = jnp.pad(yf, (0, pad), constant_values=1)

    rows = (n + pad) // LANES
    x2 = xf.reshape(rows, LANES)
    y2 = yf.reshape(rows, LANES)

    block_rows = max(SUBLANES, min(BLOCK_ROWS_MAX, _round_up(rows, SUBLANES)))
    num_blocks = pl.cdiv(rows, block_rows)

    # Split row-blocks across 2 TensorCores (v7x) when they divide evenly;
    # on single-TC chips the parallel axis is simply serialized.
    num_cores = 2 if (num_blocks >= 2 and num_blocks % 2 == 0) else 1
    blocks_per_core = num_blocks // num_cores

    needs_mask = (pad != 0) or (rows % block_rows != 0)

    kernel = functools.partial(
        _bce_kernel,
        n=n,
        block_rows=block_rows,
        blocks_per_core=blocks_per_core,
        needs_mask=needs_mask,
    )

    out = pl.pallas_call(
        kernel,
        out_shape=jax.ShapeDtypeStruct((num_cores, 1), jnp.float32),
        grid_spec=pltpu.PrefetchScalarGridSpec(
            num_scalar_prefetch=0,
            grid=(num_cores, blocks_per_core),
            in_specs=[
                pl.BlockSpec((block_rows, LANES),
                             lambda c, i: (c * blocks_per_core + i, 0)),
                pl.BlockSpec((block_rows, LANES),
                             lambda c, i: (c * blocks_per_core + i, 0)),
            ],
            out_specs=pl.BlockSpec(
                (1, 1), lambda c, i: (c, 0), memory_space=pltpu.SMEM),
            scratch_shapes=[pltpu.VMEM((SUBLANES, LANES), jnp.float32)],
        ),
        compiler_params=pltpu.CompilerParams(
            dimension_semantics=("parallel", "arbitrary")),
    )(x2, y2)

    # Per-core partials are each already divided by n; their sum is the mean.
    return jnp.sum(out)


if __name__ == "__main__":
    key = jax.random.PRNGKey(0)
    kx, ky = jax.random.split(key)

    # Small shapes consistent with a classification-map BCE loss: NCHW.
    shape = (2, 4, 16, 16)
    # predictions must lie in (0, 1) for binary_cross_entropy
    x = jax.nn.sigmoid(jax.random.normal(kx, shape, dtype=jnp.float32))
    label = jax.random.bernoulli(ky, p=0.5, shape=shape).astype(jnp.float32)

    loss = jax.block_until_ready(cls_loss(x, label))

    # sanity check vs. pure-JAX reference (same clamped-log semantics)
    ref = jnp.mean(
        -(label * jnp.maximum(jnp.log(x), -100.0)
          + (1.0 - label) * jnp.maximum(jnp.log1p(-x), -100.0)))
    assert jnp.allclose(loss, ref, rtol=1e-5, atol=1e-5), (loss, ref)

    print("KERNEL_OK")
</pallas_src>

<mosaic_0001>
module attributes {stable_mosaic.version = 11 : i64} {
  func.func @_bce_kernel(%arg0: i32, %arg1: i32, %arg2: memref<16x128xf32, #tpu.memory_space<vmem>>, %arg3: memref<16x128xf32, #tpu.memory_space<vmem>>, %arg4: memref<1x1xf32, #tpu.memory_space<smem>>, %arg5: memref<8x128xf32, #tpu.memory_space<vmem>>) attributes {dimension_semantics = [#tpu.dimension_semantics<parallel>, #tpu.dimension_semantics<arbitrary>], iteration_bounds = array<i64: 1, 1>, scalar_prefetch = 0 : i64, scratch_operands = 1 : i64, tpu.core_type = #tpu.core_type<tc>, window_params = [{transform_indices = @transform_0, window_bounds = array<i64: 16, 128>}, {transform_indices = @transform_1, window_bounds = array<i64: 16, 128>}, {transform_indices = @transform_2, window_bounds = array<i64: 1, 1>}]} {
    %c0_i32 = arith.constant 0 : i32
    %0 = arith.cmpi eq, %arg1, %c0_i32 : i32
    %1 = arith.extui %0 : i1 to i32
    %c0_i32_0 = arith.constant 0 : i32
    %2 = arith.cmpi ne, %1, %c0_i32_0 : i32
    scf.if %2 {
      %cst_15 = arith.constant 0.000000e+00 : f32
      %28 = vector.broadcast %cst_15 : f32 to vector<8x128xf32>
      %c0_16 = arith.constant 0 : index
      %c0_17 = arith.constant 0 : index
      %29 = vector.load %arg5[%c0_16, %c0_17] : memref<8x128xf32, #tpu.memory_space<vmem>>, vector<8x128xf32>
      tpu.vector_store %arg5[%c0_16, %c0_17], %28 {strides = array<i32>} : memref<8x128xf32, #tpu.memory_space<vmem>>, vector<8x128xf32>,
    } else {
    }
    %c0 = arith.constant 0 : index
    %c0_1 = arith.constant 0 : index
    %3 = vector.load %arg2[%c0, %c0_1] : memref<16x128xf32, #tpu.memory_space<vmem>>, vector<16x128xf32>
    %c0_2 = arith.constant 0 : index
    %c0_3 = arith.constant 0 : index
    %4 = vector.load %arg3[%c0_2, %c0_3] : memref<16x128xf32, #tpu.memory_space<vmem>>, vector<16x128xf32>
    %5 = math.log %3 : vector<16x128xf32>
    %cst = arith.constant -1.000000e+02 : f32
    %6 = vector.broadcast %cst : f32 to vector<16x128xf32>
    %7 = arith.maximumf %5, %6 : vector<16x128xf32>
    %cst_4 = arith.constant 0.000000e+00 : f32
    %8 = vector.broadcast %cst_4 : f32 to vector<16x128xf32>
    %9 = arith.subf %8, %3 : vector<16x128xf32>
    %10 = math.log1p %9 : vector<16x128xf32>
    %cst_5 = arith.constant -1.000000e+02 : f32
    %11 = vector.broadcast %cst_5 : f32 to vector<16x128xf32>
    %12 = arith.maximumf %10, %11 : vector<16x128xf32>
    %13 = arith.mulf %4, %7 : vector<16x128xf32>
    %cst_6 = arith.constant 1.000000e+00 : f32
    %14 = vector.broadcast %cst_6 : f32 to vector<16x128xf32>
    %15 = arith.subf %14, %4 : vector<16x128xf32>
    %16 = arith.mulf %15, %12 : vector<16x128xf32>
    %17 = arith.addf %13, %16 : vector<16x128xf32>
    %cst_7 = arith.constant 0.000000e+00 : f32
    %18 = vector.broadcast %cst_7 : f32 to vector<16x128xf32>
    %19 = arith.subf %18, %17 : vector<16x128xf32>
    %c0_8 = arith.constant 0 : index
    %c0_9 = arith.constant 0 : index
    %20 = vector.load %arg5[%c0_8, %c0_9] : memref<8x128xf32, #tpu.memory_space<vmem>>, vector<8x128xf32>
    %21 = vector.shape_cast %19 : vector<16x128xf32> to vector<2x8x128xf32>
    %cst_10 = arith.constant dense<0.000000e+00> : vector<8x128xf32>
    %22 = vector.multi_reduction <add>, %21, %cst_10 [0] : vector<2x8x128xf32> to vector<8x128xf32>
    %23 = arith.addf %20, %22 : vector<8x128xf32>
    %c0_11 = arith.constant 0 : index
    %c0_12 = arith.constant 0 : index
    %24 = vector.load %arg5[%c0_11, %c0_12] : memref<8x128xf32, #tpu.memory_space<vmem>>, vector<8x128xf32>
    tpu.vector_store %arg5[%c0_11, %c0_12], %23 {strides = array<i32>} : memref<8x128xf32, #tpu.memory_space<vmem>>, vector<8x128xf32>,
    %c0_i32_13 = arith.constant 0 : i32
    %25 = arith.cmpi eq, %arg1, %c0_i32_13 : i32
    %26 = arith.extui %25 : i1 to i32
    %c0_i32_14 = arith.constant 0 : i32
    %27 = arith.cmpi ne, %26, %c0_i32_14 : i32
    scf.if %27 {
      %c0_15 = arith.constant 0 : index
      %c0_16 = arith.constant 0 : index
      %28 = vector.load %arg5[%c0_15, %c0_16] : memref<8x128xf32, #tpu.memory_space<vmem>>, vector<8x128xf32>
      %29 = vector.shape_cast %28 : vector<8x128xf32> to vector<1x8x128xf32>
      %cst_17 = arith.constant dense<0.000000e+00> : vector<1xf32>
      %30 = vector.multi_reduction <add>, %29, %cst_17 [1, 2] : vector<1x8x128xf32> to vector<1xf32>
      %31 = vector.shape_cast %30 : vector<1xf32> to vector<1x1x1xf32>
      %32 = vector.extract %31[0, 0, 0] : f32 from vector<1x1x1xf32>
      %cst_18 = arith.constant 4.8828125E-4 : f32
      %33 = arith.mulf %32, %cst_18 : f32
      %c0_19 = arith.constant 0 : index
      %c0_20 = arith.constant 0 : index
      %34 = memref.load %arg4[%c0_19, %c0_20] : memref<1x1xf32, #tpu.memory_space<smem>>
      memref.store %33, %arg4[%c0_19, %c0_20] : memref<1x1xf32, #tpu.memory_space<smem>>
    } else {
    }
    return
  }
  func.func @transform_0(%arg0: i32, %arg1: i32) -> (i32, i32) {
    %c1_i32 = arith.constant 1 : i32
    %0 = arith.muli %arg0, %c1_i32 : i32
    %1 = arith.addi %0, %arg1 : i32
    %c0_i32 = arith.constant 0 : i32
    %c0_i32_0 = arith.constant 0 : i32
    return %1, %c0_i32 : i32, i32
  }
  func.func @transform_1(%arg0: i32, %arg1: i32) -> (i32, i32) {
    %c1_i32 = arith.constant 1 : i32
    %0 = arith.muli %arg0, %c1_i32 : i32
    %1 = arith.addi %0, %arg1 : i32
    %c0_i32 = arith.constant 0 : i32
    %c0_i32_0 = arith.constant 0 : i32
    return %1, %c0_i32 : i32, i32
  }
  func.func @transform_2(%arg0: i32, %arg1: i32) -> (i32, i32) {
    %c0_i32 = arith.constant 0 : i32
    %c0_i32_0 = arith.constant 0 : i32
    return %arg0, %c0_i32 : i32, i32
  }
}

</mosaic_0001>

<llo_original>
// kernel: tpu_custom_call.1
$region0: #{tpu_custom_call.1}
  #allocation0 [shape = 'u32[]', space=smem, size = 0x4, offset = 0x4, fixed_abs, tag = 'smem constant byte address 0x4 - core index']
  #allocation1 [shape = 'u32[144,128]{1,0:T(1,128)}', space=vmem, size = 0x12000, scoped, tag = 'internal scratch']
  #allocation2 [shape = 'f32[8,128]{1,0:T(8,128)}', space=vmem, size = 0x1000, scoped, tag = 'scratch operand']
  %s0 = inlined_call_operand.hbm [shape: f32[16,128], index: 0, kind: input, shape index: {}]
  %s1 = inlined_call_operand.hbm [shape: f32[16,128], index: 1, kind: input, shape index: {}]
  %s2 = inlined_call_operand.hbm [shape: f32[1,1], index: 2, kind: output, shape index: {}]
  %s3 = sld [smem:[#allocation0]]
  $region34: #{tpu_custom_call.1} parent=0
    _
  %s5 = ssub.s32 1, %s3
  %s6 = scalar_select 0, %s5, %s3
  $region1: #{tpu_custom_call.1} parent=0
    #allocation3 [shape = 'u8[8192]{0}', space=vmem, size = 0x2000, scoped, tag = 'input window, operand 0, single buffered']
    #allocation4 [shape = 's32[1]{0}', space=sflag, size = 0x4, scoped, tag = 'scoped memory for tpu_custom_call.1']
    #allocation5 [shape = 's32[1]{0}', space=sflag, size = 0x4, scoped, tag = 'scoped memory for tpu_custom_call.1']
    #allocation6 [shape = 'u8[8192]{0}', space=vmem, size = 0x2000, scoped, tag = 'input window, operand 1, single buffered']
    #allocation7 [shape = 's32[1]{0}', space=sflag, size = 0x4, scoped, tag = 'scoped memory for tpu_custom_call.1']
    #allocation8 [shape = 'u8[512]{0}', space=smem, size = 0x200, scoped, tag = 'output window, operand 0, single buffered']
    %7 = vsyncpa [#allocation4], 0
    %8 = vsyncpa [#allocation7], 0
    %9 = vsyncpa [#allocation5], 0
    // Predicated region
    $region2: #{tpu_custom_call.1} parent=1 // pred_check
      _
    $region3: #{tpu_custom_call.1} parent=1 // pred_check_branch
      %11 = sbr.rel (0) target = $region5
    $region4: #{tpu_custom_call.1} parent=1 // pred_region
      %s12 = sadd.s32 0, 0
      %s13 = smul.u32 2, %s12
      %s15 = ssub.s32 256, 256
      %16 = vsyncadd [#allocation4], %s15
      %s17 = smul.addr %s13, 128
      %s18 = scalar_lea.hbm %s0, %s17
      %s19 = sshll.u32 [#allocation3], 4
      %s20 = int_to_ptr.vmem [resolvable:$true] %s19
      %25 = dma.hbm_to_vmem [thread:$0]  %s18, 256, %s20, [#allocation4], 128, 128, 8
    $region5: #{tpu_custom_call.1} parent=1 // pred_fallthru
      _
    // Predicated region
    $region6: #{tpu_custom_call.1} parent=1 // pred_check
      _
    $region7: #{tpu_custom_call.1} parent=1 // pred_check_branch
      %27 = sbr.rel (0) target = $region9
    $region8: #{tpu_custom_call.1} parent=1 // pred_region
      %s28 = sadd.s32 0, 0
      %s29 = smul.u32 2, %s28
      %s31 = ssub.s32 256, 256
      %32 = vsyncadd [#allocation7], %s31
      %s33 = smul.addr %s29, 128
      %s34 = scalar_lea.hbm %s1, %s33
      %s35 = sshll.u32 [#allocation6], 4
      %s36 = int_to_ptr.vmem [resolvable:$true] %s35
      %41 = dma.hbm_to_vmem [thread:$0]  %s34, 256, %s36, [#allocation7], 128, 128, 8
    $region9: #{tpu_custom_call.1} parent=1 // pred_fallthru
      _
    // Predicated region
    $region10: #{tpu_custom_call.1} parent=1 // pred_check
      _
    $region11: #{tpu_custom_call.1} parent=1 // pred_check_branch
      %43 = sbr.rel (0) target = $region13
    $region12: #{tpu_custom_call.1} parent=1 // pred_region
      %44 = dma.done [#allocation4], 256
    $region13: #{tpu_custom_call.1} parent=1 // pred_fallthru
      _
    // Predicated region
    $region14: #{tpu_custom_call.1} parent=1 // pred_check
      _
    $region15: #{tpu_custom_call.1} parent=1 // pred_check_branch
      %46 = sbr.rel (0) target = $region17
    $region16: #{tpu_custom_call.1} parent=1 // pred_region
      %47 = dma.done [#allocation7], 256
    $region17: #{tpu_custom_call.1} parent=1 // pred_fallthru
      _
    %s48 = sadd.s32 0, 0
    %s49 = smul.u32 2, %s48
    %s50 = sadd.s32 0, 0
    %s51 = smul.u32 2, %s50
    %p52 = scmp.eq.s32.totalorder 0, 0
    // Predicated region
    $region18: #{tpu_custom_call.1} parent=1 // pred_check
      %p53 = pneg %p52
    $region19: #{tpu_custom_call.1} parent=1 // pred_check_branch
      %55 = sbr.rel (%p53) target = $region21
    $region20: #{tpu_custom_call.1} parent=1 // pred_region
      %56 = vst [vmem:[#allocation2] sm:$0xff] 0.0
    $region21: #{tpu_custom_call.1} parent=1 // pred_fallthru
      _
    %v57 = vld [vmem:[#allocation3] sm:$0xff]
    %v58 = vld [vmem:[#allocation3 + $0x8] sm:$0xff]
    %v59 = vld [vmem:[#allocation6] sm:$0xff]
    %v60 = vld [vmem:[#allocation6 + $0x8] sm:$0xff]
    %v61 = vlog2.pop %v57
    %v62 = vmul.f32 %v61, 0.6931472
    %v63 = vlog2.pop %v58
    %v64 = vmul.f32 %v63, 0.6931472
    %v65 = vmax.f32 %v62, -100.0
    %v66 = vmax.f32 %v64, -100.0
    %v67 = vsub.f32 0.0, %v57
    %v68 = vsub.f32 0.0, %v58
    %v69 = vadd.f32 %v67, 1.0
    %v70 = vlog2.pop %v69
    %v71 = vmul.f32 %v70, 0.6931472
    %v72 = vmul.f32 -0.5, %v67
    %v73 = vadd.f32 %v72, 1.0
    %v74 = vmul.f32 %v73, %v67
    %v75 = vand.u32 2147483647, %v67
    %vm76 = vcmp.lt.f32.partialorder %v75, 0.0004427343
    %v77 = vsel %vm76, %v74, %v71
    %v78 = vadd.f32 %v68, 1.0
    %v79 = vlog2.pop %v78
    %v80 = vmul.f32 %v79, 0.6931472
    %v81 = vmul.f32 -0.5, %v68
    %v82 = vadd.f32 %v81, 1.0
    %v83 = vmul.f32 %v82, %v68
    %v84 = vand.u32 2147483647, %v68
    %vm85 = vcmp.lt.f32.partialorder %v84, 0.0004427343
    %v86 = vsel %vm85, %v83, %v80
    %v87 = vmax.f32 %v77, -100.0
    %v88 = vmax.f32 %v86, -100.0
    %v89 = vmul.f32 %v59, %v65
    %v90 = vmul.f32 %v60, %v66
    %v91 = vsub.f32 1.0, %v59
    %v92 = vsub.f32 1.0, %v60
    %v93 = vmul.f32 %v91, %v87
    %v94 = vmul.f32 %v92, %v88
    %v95 = vadd.f32 %v89, %v93
    %v96 = vadd.f32 %v90, %v94
    %v97 = vsub.f32 0.0, %v95
    %v98 = vsub.f32 0.0, %v96
    %v99 = vld [vmem:[#allocation2] sm:$0xff]
    %v100 = vadd.f32 %v97, %v98
    %v101 = vadd.f32 %v99, %v100
    %102 = vst [vmem:[#allocation2] sm:$0xff] %v101
    // Predicated region
    $region22: #{tpu_custom_call.1} parent=1 // pred_check
      %p103 = pneg %p52
    $region23: #{tpu_custom_call.1} parent=1 // pred_check_branch
      %105 = sbr.rel (%p103) target = $region25
    $region24: #{tpu_custom_call.1} parent=1 // pred_region
      %v106 = vld [vmem:[#allocation2] sm:$0xff]
      %107 = vadd.xlane.f32.xlu0 %v106
      %v108 = vpop.xlane.xlu0 %107
      %v109 = vrot.slane %v108, 4
      %v110 = vadd.f32 %v108, %v109
      %v111 = vrot.slane %v110, 2
      %v112 = vadd.f32 %v110, %v111
      %v113 = vrot.slane %v112, 1
      %v114 = vadd.f32 %v112, %v113
      %s115 = vtos %v114
      %s116 = smul.f32 %s115, 0.00048828125
      %s117 = scalar_lea.smem [#allocation8], 0
      %118 = sst [smem:[%s117]] %s116
    $region25: #{tpu_custom_call.1} parent=1 // pred_fallthru
      _
    // Predicated region
    $region26: #{tpu_custom_call.1} parent=1 // pred_check
      _
    $region27: #{tpu_custom_call.1} parent=1 // pred_check_branch
      %120 = sbr.rel (0) target = $region29
    $region28: #{tpu_custom_call.1} parent=1 // pred_region
      %s122 = ssub.s32 16, 16
      %123 = vsyncadd [#allocation5], %s122
      %126 = dma.smem_to_hbm [#allocation8], 16, %s2, [#allocation5]
    $region29: #{tpu_custom_call.1} parent=1 // pred_fallthru
      _
    // Predicated region
    $region30: #{tpu_custom_call.1} parent=1 // pred_check
      _
    $region31: #{tpu_custom_call.1} parent=1 // pred_check_branch
      %128 = sbr.rel (0) target = $region33
    $region32: #{tpu_custom_call.1} parent=1 // pred_region
      %129 = dma.done [#allocation5], 16
    $region33: #{tpu_custom_call.1} parent=1 // pred_fallthru
      _
    %130 = sfence
    %131 = vsyncpa [#allocation4], 1
    %132 = vsyncpa [#allocation7], 1
    %133 = vsyncpa [#allocation5], 1

</llo_original>
